<compile_context>
chip_gen: v7x
topology: tpu7x:2x2x1
jax: 0.10.0
libtpu: 0.0.40
codegen_flags: <defaults>
</compile_context>

<pallas_src>
import functools

import numpy as np
import jax
import jax.numpy as jnp
from jax import lax
from jax.experimental import pallas as pl
from jax.experimental.pallas import tpu as pltpu


# ----------------------------------------------------------------------------
# filter / layout helpers (glue, pure XLA)
# ----------------------------------------------------------------------------
def _make_fir_kernel(fir_kernel, gain=1.0):
    k = np.asarray(fir_kernel, dtype=np.float32)
    if k.ndim == 1:
        k = np.outer(k, k)
    k = k / np.sum(k)
    return k * gain  # (kh, kw)


def _pack_phases(x, pad0, pad1):
    """NCHW -> padded, channels-last, 2x2 polyphase packed into the LANE dim.

    Returns (N, ceil(Hp/2), ceil(Wp/2), 4*C) with
        out[n, i, j, p*C + c] = x_padded[n, 2i+r, 2j+s, c],  p = 2*r + s.
    Single fused XLA copy (pad + transpose + reshape); extra parity padding is
    never read by the kernels.
    """
    n, c, h, w = x.shape
    hp, wp = h + pad0 + pad1, w + pad0 + pad1
    eh, ew = hp % 2, wp % 2
    xt = jnp.transpose(x, (0, 2, 3, 1))                       # (N, H, W, C)
    xp = jnp.pad(xt, ((0, 0), (pad0, pad1 + eh), (pad0, pad1 + ew), (0, 0)))
    hp += eh
    wp += ew
    ph = xp.reshape(n, hp // 2, 2, wp // 2, 2, c)             # (n, i, r, j, s, c)
    ph = jnp.transpose(ph, (0, 1, 3, 2, 4, 5))                # (n, i, j, r, s, c)
    return ph.reshape(n, hp // 2, wp // 2, 4 * c)


def _vmem_capacity_bytes():
    try:
        return int(pltpu.get_tpu_info().vmem_capacity_bytes)
    except Exception:
        return 64 << 20          # v7x per-core physical; conservative elsewhere


def _tensorcores_per_chip():
    try:
        kind = jax.devices()[0].device_kind.lower()
    except Exception:
        return 1
    return 2 if ("v7" in kind or "7x" in kind) else 1


def _plan(n, in_item_bytes, out_item_bytes, stationary_bytes):
    """Pick items-per-grid-step (tn) and an explicit scoped-VMEM limit.

    Budget = 2x double-buffered (in + out) blocks + 2x stationary weights,
    targeted at ~half of physical per-core VMEM.  On 2-TC chips keep >= 4 grid
    steps (2 per TensorCore) when the batch allows; on 1-TC chips tn is
    budget-limited only.
    """
    cap = _vmem_capacity_bytes()
    per_item = 2 * (in_item_bytes + out_item_bytes)
    budget = cap // 2
    avail = max(per_item, budget - 2 * stationary_bytes)
    tn = max(1, min(n, avail // per_item))
    if _tensorcores_per_chip() >= 2 and n >= 4:
        tn = min(tn, n // 4)
    tn = max(1, int(tn))
    while n % tn:                                   # keep the grid un-ragged
        tn -= 1
    need = tn * per_item + 2 * stationary_bytes + (2 << 20)
    vmem_limit = int(min(cap - (2 << 20), max(32 << 20, int(need * 1.25))))
    return tn, vmem_limit


# ----------------------------------------------------------------------------
# Pallas kernel: use_conv = False  (depthwise FIR + stride-2 decimation, VPU)
# ----------------------------------------------------------------------------
def _fir_down_kernel(ph_ref, wtab_ref, o_ref, *, oh, ow, c, tn):
    # ph_ref  : (tn, ph_h, ph_w, 4C)  polyphase-packed input (lane dim = 4C)
    # wtab_ref: (4, 4C) f32           per-tap, phase-broadcast FIR weights
    # o_ref   : (tn, oh, ow, C)
    wv = [wtab_ref[t:t + 1, :] for t in range(4)]   # hoisted: loaded once, (1, 4C)

    def item(n):
        def tap(a, b):
            t = ph_ref[n, a:a + oh, b:b + ow, :].astype(jnp.float32)  # windowed load
            return wv[2 * a + b] * t
        # 4 wide FMAs (tree-summed) instead of a 16-term serial chain
        acc4 = (tap(0, 0) + tap(0, 1)) + (tap(1, 0) + tap(1, 1))      # (oh, ow, 4C)
        out = ((acc4[:, :, 0 * c:1 * c] + acc4[:, :, 1 * c:2 * c]) +
               (acc4[:, :, 2 * c:3 * c] + acc4[:, :, 3 * c:4 * c]))   # phase reduce
        o_ref[n] = out.astype(o_ref.dtype)

    if tn == 1:
        item(0)
    else:
        def body(n, carry):
            item(n)
            return carry
        lax.fori_loop(0, tn, body, 0)


def _fir_downsample_no_conv(x, fir_kernel=(1, 3, 3, 1), factor=2, gain=1.0):
    assert factor == 2, "kernel specialized to factor=2 (as used by forward())"
    k2d = _make_fir_kernel(fir_kernel, gain)
    kf = np.flip(k2d, (0, 1))                     # conv w/ flipped kernel == corr w/ kf
    kh = kf.shape[0]
    assert kh % 2 == 0, "FIR length must be even for the 2x2 polyphase kernel"
    p = kh - factor
    pad0, pad1 = (p + 1) // 2, p // 2

    n, c, h, w = x.shape
    oh = (h + pad0 + pad1 - kh) // factor + 1
    ow = (w + pad0 + pad1 - kh) // factor + 1

    # Weight table: row t = a*2+b, col p*C + c holds kf[2a+r, 2b+s] with p = 2r+s.
    w4 = kf.reshape(2, 2, 2, 2).transpose(0, 2, 1, 3).reshape(4, 4)
    wtab = jnp.asarray(np.repeat(w4, c, axis=1), jnp.float32)          # (4, 4C)

    ph = _pack_phases(x, pad0, pad1)                                   # (N, ph_h, ph_w, 4C)
    _, ph_h, ph_w, c4 = ph.shape
    tn, vmem_limit = _plan(n,
                           ph_h * ph_w * c4 * ph.dtype.itemsize,
                           oh * ow * c * x.dtype.itemsize,
                           wtab.size * 4)

    kernel = functools.partial(_fir_down_kernel, oh=oh, ow=ow, c=c, tn=tn)
    y = pl.pallas_call(
        kernel,
        out_shape=jax.ShapeDtypeStruct((n, oh, ow, c), x.dtype),
        grid=(n // tn,),
        in_specs=[pl.BlockSpec((tn, ph_h, ph_w, c4), lambda i: (i, 0, 0, 0)),
                  pl.BlockSpec((4, c4), lambda i: (0, 0))],            # stationary
        out_specs=pl.BlockSpec((tn, oh, ow, c), lambda i: (i, 0, 0, 0)),
        compiler_params=pltpu.CompilerParams(
            dimension_semantics=("parallel",), vmem_limit_bytes=vmem_limit),
    )(ph, wtab)
    # output-sized transpose back to the module's NCHW contract
    return jnp.transpose(y, (0, 3, 1, 2))


# ----------------------------------------------------------------------------
# Pallas kernel: use_conv = True  (FIR + dense 3x3 stride-2 conv, fused, MXU)
# ----------------------------------------------------------------------------
def _fir_conv_down_kernel(ph_ref, kc_ref, b_ref, o_ref, *, oh, ow, n_ab, tn):
    # ph_ref: (tn, ph_h, ph_w, 4*c_in)   polyphase-packed input (lane dim = 4*c_in)
    # kc_ref: (n_ab*n_ab, 4*c_in, c_out) fused FIR(x)conv weights, input dtype (VMEM)
    # b_ref : (1, c_out) f32             bias (VMEM)
    # o_ref : (tn, oh*ow, c_out)
    npix = oh * ow
    c_out = o_ref.shape[-1]
    bias = b_ref[...]                              # hoisted: loaded once

    def item(n):
        # TODO(synk): on v7x the 9 tap dots could accumulate in the MXU result
        # buffer (MRB) via explicit matmul_push_rhs/acc_lhs/pop; left to Mosaic.
        acc = jnp.zeros((npix, c_out), jnp.float32)
        for a in range(n_ab):
            for b in range(n_ab):
                tap = ph_ref[n, a:a + oh, b:b + ow, :]          # input dtype, NO f32 upcast
                tap = tap.reshape(npix, -1)                     # (npix, 4*c_in)
                acc = acc + jnp.dot(tap, kc_ref[a * n_ab + b],
                                    preferred_element_type=jnp.float32)
        o_ref[n] = (acc + bias).astype(o_ref.dtype)

    if tn == 1:
        item(0)
    else:
        def body(n, carry):
            item(n)
            return carry
        lax.fori_loop(0, tn, body, 0)


def _fir_downsample_conv(x, weight, bias, fir_kernel=(1, 3, 3, 1), factor=2, gain=1.0):
    assert factor == 2
    k2d = _make_fir_kernel(fir_kernel, gain)
    kf = jnp.asarray(np.flip(k2d, (0, 1)), jnp.float32)     # (kh, kw)
    kh = k2d.shape[0]
    c_out, c_in, conv_h, conv_w = weight.shape
    p = kh - factor + (conv_w - 1)
    pad0, pad1 = (p + 1) // 2, p // 2

    n, c, h, w = x.shape
    assert c == c_in
    fir_h = h + pad0 + pad1 - kh + 1
    fir_w = w + pad0 + pad1 - kh + 1
    oh = (fir_h - conv_h) // factor + 1
    ow = (fir_w - conv_w) // factor + 1

    # Fused kernel: Kc[o,c,u,v] = sum_{ky,kx} W[o,c,ky,kx] * kf[u-ky, v-kx]
    ku = conv_h + kh - 1
    assert ku % 2 == 0, "fused kernel size must be even for the 2x2 polyphase path"
    n_ab = ku // 2
    kc = jnp.zeros((c_out, c_in, ku, ku), jnp.float32)
    for ky in range(conv_h):
        for kx in range(conv_w):
            kc = kc.at[:, :, ky:ky + kh, kx:kx + kh].add(
                weight[:, :, ky, kx].astype(jnp.float32)[:, :, None, None] * kf[None, None])
    # (o, c, u=2a+r, v=2b+s) -> (a, b, r, s, c, o) -> (9, 4*c_in, c_out); row order
    # (2r+s)*c_in + c matches the lane order produced by _pack_phases.
    kc9 = kc.reshape(c_out, c_in, n_ab, 2, n_ab, 2)
    kc9 = jnp.transpose(kc9, (2, 4, 3, 5, 1, 0)).reshape(n_ab * n_ab, 4 * c_in, c_out)
    kc9 = kc9.astype(x.dtype)    # MXU operands in the input dtype (bf16-friendly)

    ph = _pack_phases(x, pad0, pad1)                         # (N, ph_h, ph_w, 4*c_in)
    _, ph_h, ph_w, c4 = ph.shape
    tn, vmem_limit = _plan(n,
                           ph_h * ph_w * c4 * ph.dtype.itemsize,
                           oh * ow * c_out * x.dtype.itemsize,
                           kc9.size * kc9.dtype.itemsize + 4 * c_out)

    kernel = functools.partial(_fir_conv_down_kernel, oh=oh, ow=ow, n_ab=n_ab, tn=tn)
    y = pl.pallas_call(
        kernel,
        out_shape=jax.ShapeDtypeStruct((n, oh * ow, c_out), x.dtype),
        grid=(n // tn,),
        in_specs=[
            pl.BlockSpec((tn, ph_h, ph_w, c4), lambda i: (i, 0, 0, 0)),
            pl.BlockSpec((n_ab * n_ab, 4 * c_in, c_out), lambda i: (0, 0, 0)),  # stationary
            pl.BlockSpec((1, c_out), lambda i: (0, 0)),                         # stationary
        ],
        out_specs=pl.BlockSpec((tn, oh * ow, c_out), lambda i: (i, 0, 0)),
        compiler_params=pltpu.CompilerParams(
            dimension_semantics=("parallel",), vmem_limit_bytes=vmem_limit),
    )(ph, kc9, bias.reshape(1, c_out).astype(jnp.float32))
    return jnp.transpose(y.reshape(n, oh, ow, c_out), (0, 3, 1, 2))


# ----------------------------------------------------------------------------
# Module-equivalent forward
# ----------------------------------------------------------------------------
@functools.partial(jax.jit, static_argnames=("use_conv", "fir_kernel"))
def fir_downsample2d(x, use_conv=False, weight=None, bias=None,
                     fir_kernel=(1, 3, 3, 1)):
    """Equivalent of FirDownsample2D(...).forward(x) with x in NCHW."""
    if use_conv:
        return _fir_downsample_conv(x, weight, bias, fir_kernel=fir_kernel, factor=2)
    return _fir_downsample_no_conv(x, fir_kernel=fir_kernel, factor=2)


# ----------------------------------------------------------------------------
# Pure-JAX references (mirror upfirdn2d_native + F.conv2d)
# ----------------------------------------------------------------------------
def _upfirdn2d_ref(x, kernel2d, down, pad):
    n, c, _, _ = x.shape
    pad0, pad1 = pad
    xp = jnp.pad(x, ((0, 0), (0, 0), (pad0, pad1), (pad0, pad1)))
    wk = jnp.flip(kernel2d, (0, 1))[None, None].astype(jnp.float32)
    y = lax.conv_general_dilated(
        xp.reshape(n * c, 1, xp.shape[2], xp.shape[3]).astype(jnp.float32),
        wk, window_strides=(down, down), padding="VALID")
    return y.reshape(n, c, y.shape[2], y.shape[3]).astype(x.dtype)


def ref_no_conv(x, fir_kernel=(1, 3, 3, 1), factor=2):
    k = jnp.asarray(_make_fir_kernel(fir_kernel))
    p = k.shape[0] - factor
    return _upfirdn2d_ref(x, k, down=factor, pad=((p + 1) // 2, p // 2))


def ref_conv(x, weight, bias, fir_kernel=(1, 3, 3, 1), factor=2):
    k = jnp.asarray(_make_fir_kernel(fir_kernel))
    conv_w = weight.shape[3]
    p = k.shape[0] - factor + (conv_w - 1)
    y = _upfirdn2d_ref(x, k, down=1, pad=((p + 1) // 2, p // 2))
    y = lax.conv_general_dilated(y, weight, window_strides=(factor, factor),
                                 padding="VALID")
    return y + bias.reshape(1, -1, 1, 1)


# ----------------------------------------------------------------------------
if __name__ == "__main__":
    key = jax.random.PRNGKey(0)
    kx, kw, kb, kx2, kw2, kb2 = jax.random.split(key, 6)

    # Case 1: module-default small shapes.
    N, C, H, W = 2, 4, 16, 16
    C_OUT = 4  # out_channels defaults to channels
    x = jax.random.normal(kx, (N, C, H, W), dtype=jnp.float32)
    conv_weight = 0.1 * jax.random.normal(kw, (C_OUT, C, 3, 3), dtype=jnp.float32)
    conv_bias = 0.1 * jax.random.normal(kb, (C_OUT,), dtype=jnp.float32)

    y0 = jax.block_until_ready(fir_downsample2d(x, use_conv=False))
    y1 = jax.block_until_ready(
        fir_downsample2d(x, use_conv=True, weight=conv_weight, bias=conv_bias))
    r0 = ref_no_conv(x)
    r1 = ref_conv(x, conv_weight, conv_bias)

    assert y0.shape == (N, C, H // 2, W // 2), y0.shape
    assert y1.shape == (N, C_OUT, H // 2, W // 2), y1.shape
    assert jnp.allclose(y0, r0, atol=1e-5, rtol=1e-5), float(jnp.abs(y0 - r0).max())
    assert jnp.allclose(y1, r1, atol=1e-4, rtol=1e-4), float(jnp.abs(y1 - r1).max())

    # Case 2: larger batch (exercises the multi-item fori_loop path), odd spatial
    # extent (parity padding), and c_out != c_in.
    N2, C2, H2, W2, C2_OUT = 8, 8, 9, 9, 16
    x2 = jax.random.normal(kx2, (N2, C2, H2, W2), dtype=jnp.float32)
    conv_weight2 = 0.1 * jax.random.normal(kw2, (C2_OUT, C2, 3, 3), dtype=jnp.float32)
    conv_bias2 = 0.1 * jax.random.normal(kb2, (C2_OUT,), dtype=jnp.float32)

    z0 = jax.block_until_ready(fir_downsample2d(x2, use_conv=False))
    z1 = jax.block_until_ready(
        fir_downsample2d(x2, use_conv=True, weight=conv_weight2, bias=conv_bias2))
    s0 = ref_no_conv(x2)
    s1 = ref_conv(x2, conv_weight2, conv_bias2)

    assert z0.shape == s0.shape and z1.shape == s1.shape, (z0.shape, z1.shape)
    assert jnp.allclose(z0, s0, atol=1e-5, rtol=1e-5), float(jnp.abs(z0 - s0).max())
    assert jnp.allclose(z1, s1, atol=1e-4, rtol=1e-4), float(jnp.abs(z1 - s1).max())

    print("KERNEL_OK")
</pallas_src>

<mosaic_0001>
module attributes {stable_mosaic.version = 11 : i64} {
  func.func @_fir_down_kernel(%arg0: i32, %arg1: memref<2x9x9x16xf32, #tpu.memory_space<vmem>>, %arg2: memref<4x16xf32, #tpu.memory_space<vmem>>, %arg3: memref<2x8x8x4xf32, #tpu.memory_space<vmem>>) attributes {dimension_semantics = [#tpu.dimension_semantics<parallel>], iteration_bounds = array<i64: 1>, scalar_prefetch = 0 : i64, scratch_operands = 0 : i64, tpu.core_type = #tpu.core_type<tc>, window_params = [{transform_indices = @transform_0, window_bounds = array<i64: 2, 9, 9, 16>}, {pipeline_mode = #tpu.pipeline_mode<synchronous>, transform_indices = @transform_1, window_bounds = array<i64: 4, 16>}, {transform_indices = @transform_2, window_bounds = array<i64: 2, 8, 8, 4>}]} {
    %c0 = arith.constant 0 : index
    %c0_0 = arith.constant 0 : index
    %0 = vector.load %arg2[%c0, %c0_0] : memref<4x16xf32, #tpu.memory_space<vmem>>, vector<1x16xf32>
    %c1 = arith.constant 1 : index
    %c0_1 = arith.constant 0 : index
    %1 = vector.load %arg2[%c1, %c0_1] : memref<4x16xf32, #tpu.memory_space<vmem>>, vector<1x16xf32>
    %c2 = arith.constant 2 : index
    %c0_2 = arith.constant 0 : index
    %2 = vector.load %arg2[%c2, %c0_2] : memref<4x16xf32, #tpu.memory_space<vmem>>, vector<1x16xf32>
    %c3 = arith.constant 3 : index
    %c0_3 = arith.constant 0 : index
    %3 = vector.load %arg2[%c3, %c0_3] : memref<4x16xf32, #tpu.memory_space<vmem>>, vector<1x16xf32>
    %c0_i32 = arith.constant 0 : i32
    %c2_i32 = arith.constant 2 : i32
    %4 = arith.addi %c0_i32, %c2_i32 : i32
    %c1_i32 = arith.constant 1 : i32
    scf.for %arg4 = %c0_i32 to %4 step %c1_i32  : i32 {
      %5 = arith.index_cast %arg4 : i32 to index
      %c0_5 = arith.constant 0 : index
      %c0_6 = arith.constant 0 : index
      %c0_7 = arith.constant 0 : index
      %6 = vector.load %arg1[%5, %c0_5, %c0_6, %c0_7] : memref<2x9x9x16xf32, #tpu.memory_space<vmem>>, vector<1x8x8x16xf32>
      %7 = vector.shape_cast %6 : vector<1x8x8x16xf32> to vector<8x8x16xf32>
      %8 = vector.shape_cast %0 : vector<1x16xf32> to vector<1x1x16xf32>
      %9 = vector.broadcast %8 : vector<1x1x16xf32> to vector<8x8x16xf32>
      %10 = arith.mulf %9, %7 : vector<8x8x16xf32>
      %11 = arith.index_cast %arg4 : i32 to index
      %c0_8 = arith.constant 0 : index
      %c1_9 = arith.constant 1 : index
      %c0_10 = arith.constant 0 : index
      %12 = vector.load %arg1[%11, %c0_8, %c1_9, %c0_10] : memref<2x9x9x16xf32, #tpu.memory_space<vmem>>, vector<1x8x8x16xf32>
      %13 = vector.shape_cast %12 : vector<1x8x8x16xf32> to vector<8x8x16xf32>
      %14 = vector.shape_cast %1 : vector<1x16xf32> to vector<1x1x16xf32>
      %15 = vector.broadcast %14 : vector<1x1x16xf32> to vector<8x8x16xf32>
      %16 = arith.mulf %15, %13 : vector<8x8x16xf32>
      %17 = arith.addf %10, %16 : vector<8x8x16xf32>
      %18 = arith.index_cast %arg4 : i32 to index
      %c1_11 = arith.constant 1 : index
      %c0_12 = arith.constant 0 : index
      %c0_13 = arith.constant 0 : index
      %19 = vector.load %arg1[%18, %c1_11, %c0_12, %c0_13] : memref<2x9x9x16xf32, #tpu.memory_space<vmem>>, vector<1x8x8x16xf32>
      %20 = vector.shape_cast %19 : vector<1x8x8x16xf32> to vector<8x8x16xf32>
      %21 = vector.shape_cast %2 : vector<1x16xf32> to vector<1x1x16xf32>
      %22 = vector.broadcast %21 : vector<1x1x16xf32> to vector<8x8x16xf32>
      %23 = arith.mulf %22, %20 : vector<8x8x16xf32>
      %24 = arith.index_cast %arg4 : i32 to index
      %c1_14 = arith.constant 1 : index
      %c1_15 = arith.constant 1 : index
      %c0_16 = arith.constant 0 : index
      %25 = vector.load %arg1[%24, %c1_14, %c1_15, %c0_16] : memref<2x9x9x16xf32, #tpu.memory_space<vmem>>, vector<1x8x8x16xf32>
      %26 = vector.shape_cast %25 : vector<1x8x8x16xf32> to vector<8x8x16xf32>
      %27 = vector.shape_cast %3 : vector<1x16xf32> to vector<1x1x16xf32>
      %28 = vector.broadcast %27 : vector<1x1x16xf32> to vector<8x8x16xf32>
      %29 = arith.mulf %28, %26 : vector<8x8x16xf32>
      %30 = arith.addf %23, %29 : vector<8x8x16xf32>
      %31 = arith.addf %17, %30 : vector<8x8x16xf32>
      %32 = vector.extract_strided_slice %31 {offsets = [0, 0, 0], sizes = [8, 8, 4], strides = [1, 1, 1]} : vector<8x8x16xf32> to vector<8x8x4xf32>
      %33 = vector.extract_strided_slice %31 {offsets = [0, 0, 4], sizes = [8, 8, 4], strides = [1, 1, 1]} : vector<8x8x16xf32> to vector<8x8x4xf32>
      %34 = arith.addf %32, %33 : vector<8x8x4xf32>
      %35 = vector.extract_strided_slice %31 {offsets = [0, 0, 8], sizes = [8, 8, 4], strides = [1, 1, 1]} : vector<8x8x16xf32> to vector<8x8x4xf32>
      %36 = vector.extract_strided_slice %31 {offsets = [0, 0, 12], sizes = [8, 8, 4], strides = [1, 1, 1]} : vector<8x8x16xf32> to vector<8x8x4xf32>
      %37 = arith.addf %35, %36 : vector<8x8x4xf32>
      %38 = arith.addf %34, %37 : vector<8x8x4xf32>
      %39 = arith.index_cast %arg4 : i32 to index
      %c0_17 = arith.constant 0 : index
      %c0_18 = arith.constant 0 : index
      %c0_19 = arith.constant 0 : index
      %40 = vector.load %arg3[%39, %c0_17, %c0_18, %c0_19] : memref<2x8x8x4xf32, #tpu.memory_space<vmem>>, vector<1x8x8x4xf32>
      %41 = vector.shape_cast %40 : vector<1x8x8x4xf32> to vector<8x8x4xf32>
      %42 = vector.shape_cast %38 : vector<8x8x4xf32> to vector<1x8x8x4xf32>
      tpu.vector_store %arg3[%39, %c0_17, %c0_18, %c0_19], %42 {strides = array<i32>} : memref<2x8x8x4xf32, #tpu.memory_space<vmem>>, vector<1x8x8x4xf32>,
    }
    %c2_i32_4 = arith.constant 2 : i32
    return
  }
  func.func @transform_0(%arg0: i32) -> (i32, i32, i32, i32) {
    %c0_i32 = arith.constant 0 : i32
    %c0_i32_0 = arith.constant 0 : i32
    %c0_i32_1 = arith.constant 0 : i32
    %c0_i32_2 = arith.constant 0 : i32
    return %arg0, %c0_i32, %c0_i32_0, %c0_i32_1 : i32, i32, i32, i32
  }
  func.func @transform_1(%arg0: i32) -> (i32, i32) {
    %c0_i32 = arith.constant 0 : i32
    %c0_i32_0 = arith.constant 0 : i32
    %c0_i32_1 = arith.constant 0 : i32
    return %c0_i32, %c0_i32_0 : i32, i32
  }
  func.func @transform_2(%arg0: i32) -> (i32, i32, i32, i32) {
    %c0_i32 = arith.constant 0 : i32
    %c0_i32_0 = arith.constant 0 : i32
    %c0_i32_1 = arith.constant 0 : i32
    %c0_i32_2 = arith.constant 0 : i32
    return %arg0, %c0_i32, %c0_i32_0, %c0_i32_1 : i32, i32, i32, i32
  }
}

</mosaic_0001>

<llo_original>
// kernel: fir_downsample2d.1
$region0: #{fir_downsample2d.1}
  #allocation0 [shape = 'u32[]', space=smem, size = 0x4, offset = 0x4, fixed_abs, tag = 'smem constant byte address 0x4 - core index']
  #allocation1 [shape = 'u32[144,128]{1,0:T(1,128)}', space=vmem, size = 0x12000, scoped, tag = 'internal scratch']
  %s0 = inlined_call_operand.vmem [shape: f32[2,9,9,16], index: 0, kind: input, shape index: {}]
  %s1 = inlined_call_operand.vmem [shape: f32[4,16], index: 1, kind: input, shape index: {}]
  %s2 = inlined_call_operand.vmem [shape: f32[2,8,8,4], index: 2, kind: output, shape index: {}]
  %s3 = sld [smem:[#allocation0]]
  $region25: #{fir_downsample2d.1} parent=0
    _
  %s5 = ssub.s32 1, %s3
  %s6 = scalar_select 0, %s5, %s3
  // Predicated region
  $region2: #{fir_downsample2d.1} parent=0 // pred_check
    _
  $region3: #{fir_downsample2d.1} parent=0 // pred_check_branch
    %8 = sbr.rel (0) target = $region5
  $region4: #{fir_downsample2d.1} parent=0 // pred_region
    _
  $region5: #{fir_downsample2d.1} parent=0 // pred_fallthru
    _
  // Predicated region
  $region6: #{fir_downsample2d.1} parent=0 // pred_check
    _
  $region7: #{fir_downsample2d.1} parent=0 // pred_check_branch
    %10 = sbr.rel (0) target = $region9
  $region8: #{fir_downsample2d.1} parent=0 // pred_region
    _
  $region9: #{fir_downsample2d.1} parent=0 // pred_fallthru
    _
  %v11 = vld [vmem:[%s1] sm:$0x1]
  %v12 = vld [vmem:[%s1 + $0x1] sm:$0x1]
  %v13 = vld [vmem:[%s1 + $0x2] sm:$0x1]
  %v14 = vld [vmem:[%s1 + $0x3] sm:$0x1]
  loop: start=0, step=1, limit=2
  $region10: #{fir_downsample2d.1} parent=0 // loop_pre_header
    _
  $region11: #{fir_downsample2d.1} parent=0 // loop_header
    %s16 = sphi 0, %s20
    %p17 = scmp.ge.s32.totalorder %s16, 2
  $region12: #{fir_downsample2d.1} parent=0 // loop_header_branch
    %19 = sbr.rel (%p17) target = $region16
  $region13: #{fir_downsample2d.1} parent=0 // loop_body
    %s21 = smul.u32 %s16, 144
    %s22 = scalar_lea.vmem %s0, %s21
    %v23 = vld [vmem:[%s22] sm:$0xff]
    %v24 = vld [vmem:[%s22 + $0x10] sm:$0xff]
    %v25 = vld [vmem:[%s22 + $0x20] sm:$0xff]
    %v26 = vld [vmem:[%s22 + $0x30] sm:$0xff]
    %v27 = vld [vmem:[%s22 + $0x40] sm:$0xff]
    %v28 = vld [vmem:[%s22 + $0x50] sm:$0xff]
    %v29 = vld [vmem:[%s22 + $0x60] sm:$0xff]
    %v30 = vld [vmem:[%s22 + $0x70] sm:$0xff]
    %v31 = vlaneseq
    %v32 = vshrl.u32 %v31, 7
    %v33 = vsub.s32 0, %v32
    %v34 = vrot.slane %v11, %v33
    %v35 = vmul.f32 %v34, %v23
    %v36 = vmul.f32 %v34, %v24
    %v37 = vmul.f32 %v34, %v25
    %v38 = vmul.f32 %v34, %v26
    %v39 = vmul.f32 %v34, %v27
    %v40 = vmul.f32 %v34, %v28
    %v41 = vmul.f32 %v34, %v29
    %v42 = vmul.f32 %v34, %v30
    %v43 = vld [vmem:[%s22 + $0x1] sm:$0xff]
    %v44 = vld [vmem:[%s22 + $0x11] sm:$0xff]
    %v45 = vld [vmem:[%s22 + $0x21] sm:$0xff]
    %v46 = vld [vmem:[%s22 + $0x31] sm:$0xff]
    %v47 = vld [vmem:[%s22 + $0x41] sm:$0xff]
    %v48 = vld [vmem:[%s22 + $0x51] sm:$0xff]
    %v49 = vld [vmem:[%s22 + $0x61] sm:$0xff]
    %v50 = vld [vmem:[%s22 + $0x71] sm:$0xff]
    %v51 = vlaneseq
    %v52 = vshrl.u32 %v51, 7
    %v53 = vsub.s32 0, %v52
    %v54 = vrot.slane %v12, %v53
    %v55 = vmul.f32 %v54, %v43
    %v56 = vmul.f32 %v54, %v44
    %v57 = vmul.f32 %v54, %v45
    %v58 = vmul.f32 %v54, %v46
    %v59 = vmul.f32 %v54, %v47
    %v60 = vmul.f32 %v54, %v48
    %v61 = vmul.f32 %v54, %v49
    %v62 = vmul.f32 %v54, %v50
    %v63 = vadd.f32 %v35, %v55
    %v64 = vadd.f32 %v36, %v56
    %v65 = vadd.f32 %v37, %v57
    %v66 = vadd.f32 %v38, %v58
    %v67 = vadd.f32 %v39, %v59
    %v68 = vadd.f32 %v40, %v60
    %v69 = vadd.f32 %v41, %v61
    %v70 = vadd.f32 %v42, %v62
    %s71 = sadd.s32 16, %s21
    %s72 = scalar_lea.vmem %s0, %s71
    %v73 = vld [vmem:[%s72] sm:$0xff]
    %v74 = vld [vmem:[%s72 + $0x10] sm:$0xff]
    %v75 = vld [vmem:[%s72 + $0x20] sm:$0xff]
    %v76 = vld [vmem:[%s72 + $0x30] sm:$0xff]
    %v77 = vld [vmem:[%s72 + $0x40] sm:$0xff]
    %v78 = vld [vmem:[%s72 + $0x50] sm:$0xff]
    %v79 = vld [vmem:[%s72 + $0x60] sm:$0xff]
    %v80 = vld [vmem:[%s72 + $0x70] sm:$0xff]
    %v81 = vlaneseq
    %v82 = vshrl.u32 %v81, 7
    %v83 = vsub.s32 0, %v82
    %v84 = vrot.slane %v13, %v83
    %v85 = vmul.f32 %v84, %v73
    %v86 = vmul.f32 %v84, %v74
    %v87 = vmul.f32 %v84, %v75
    %v88 = vmul.f32 %v84, %v76
    %v89 = vmul.f32 %v84, %v77
    %v90 = vmul.f32 %v84, %v78
    %v91 = vmul.f32 %v84, %v79
    %v92 = vmul.f32 %v84, %v80
    %v93 = vld [vmem:[%s72 + $0x1] sm:$0xff]
    %v94 = vld [vmem:[%s72 + $0x11] sm:$0xff]
    %v95 = vld [vmem:[%s72 + $0x21] sm:$0xff]
    %v96 = vld [vmem:[%s72 + $0x31] sm:$0xff]
    %v97 = vld [vmem:[%s72 + $0x41] sm:$0xff]
    %v98 = vld [vmem:[%s72 + $0x51] sm:$0xff]
    %v99 = vld [vmem:[%s72 + $0x61] sm:$0xff]
    %v100 = vld [vmem:[%s72 + $0x71] sm:$0xff]
    %v101 = vlaneseq
    %v102 = vshrl.u32 %v101, 7
    %v103 = vsub.s32 0, %v102
    %v104 = vrot.slane %v14, %v103
    %v105 = vmul.f32 %v104, %v93
    %v106 = vmul.f32 %v104, %v94
    %v107 = vmul.f32 %v104, %v95
    %v108 = vmul.f32 %v104, %v96
    %v109 = vmul.f32 %v104, %v97
    %v110 = vmul.f32 %v104, %v98
    %v111 = vmul.f32 %v104, %v99
    %v112 = vmul.f32 %v104, %v100
    %v113 = vadd.f32 %v85, %v105
    %v114 = vadd.f32 %v86, %v106
    %v115 = vadd.f32 %v87, %v107
    %v116 = vadd.f32 %v88, %v108
    %v117 = vadd.f32 %v89, %v109
    %v118 = vadd.f32 %v90, %v110
    %v119 = vadd.f32 %v91, %v111
    %v120 = vadd.f32 %v92, %v112
    %v121 = vadd.f32 %v63, %v113
    %v122 = vadd.f32 %v64, %v114
    %v123 = vadd.f32 %v65, %v115
    %v124 = vadd.f32 %v66, %v116
    %v125 = vadd.f32 %v67, %v117
    %v126 = vadd.f32 %v68, %v118
    %v127 = vadd.f32 %v69, %v119
    %v128 = vadd.f32 %v70, %v120
    %137 = vrot.lane.b32.xlu0 %v121, 124
    %v138 = vpop.permute.xlu0 %137
    %139 = vrot.lane.b32.xlu0 %v122, 124
    %v140 = vpop.permute.xlu0 %139
    %141 = vrot.lane.b32.xlu0 %v123, 124
    %v142 = vpop.permute.xlu0 %141
    %143 = vrot.lane.b32.xlu0 %v124, 124
    %v144 = vpop.permute.xlu0 %143
    %145 = vrot.lane.b32.xlu0 %v125, 124
    %v146 = vpop.permute.xlu0 %145
    %147 = vrot.lane.b32.xlu0 %v126, 124
    %v148 = vpop.permute.xlu0 %147
    %149 = vrot.lane.b32.xlu0 %v127, 124
    %v150 = vpop.permute.xlu0 %149
    %151 = vrot.lane.b32.xlu0 %v128, 124
    %v152 = vpop.permute.xlu0 %151
    %v161 = vadd.f32 %v121, %v138
    %v162 = vadd.f32 %v122, %v140
    %v163 = vadd.f32 %v123, %v142
    %v164 = vadd.f32 %v124, %v144
    %v165 = vadd.f32 %v125, %v146
    %v166 = vadd.f32 %v126, %v148
    %v167 = vadd.f32 %v127, %v150
    %v168 = vadd.f32 %v128, %v152
    %177 = vrot.lane.b32.xlu0 %v161, 120
    %v178 = vpop.permute.xlu0 %177
    %179 = vrot.lane.b32.xlu0 %v162, 120
    %v180 = vpop.permute.xlu0 %179
    %181 = vrot.lane.b32.xlu0 %v163, 120
    %v182 = vpop.permute.xlu0 %181
    %183 = vrot.lane.b32.xlu0 %v164, 120
    %v184 = vpop.permute.xlu0 %183
    %185 = vrot.lane.b32.xlu0 %v165, 120
    %v186 = vpop.permute.xlu0 %185
    %187 = vrot.lane.b32.xlu0 %v166, 120
    %v188 = vpop.permute.xlu0 %187
    %189 = vrot.lane.b32.xlu0 %v167, 120
    %v190 = vpop.permute.xlu0 %189
    %191 = vrot.lane.b32.xlu0 %v168, 120
    %v192 = vpop.permute.xlu0 %191
    %v201 = vadd.f32 %v161, %v178
    %v202 = vadd.f32 %v162, %v180
    %v203 = vadd.f32 %v163, %v182
    %v204 = vadd.f32 %v164, %v184
    %v205 = vadd.f32 %v165, %v186
    %v206 = vadd.f32 %v166, %v188
    %v207 = vadd.f32 %v167, %v190
    %v208 = vadd.f32 %v168, %v192
    %s209 = smul.u32 %s16, 64
    %s210 = scalar_lea.vmem %s2, %s209
    %vm211 = vcmask 31744
    %212 = vst.msk [vmem:[%s210] sm:$0xff] %vm211, %v201
    %213 = vst.msk [vmem:[%s210 + $0x8] sm:$0xff] %vm211, %v202
    %214 = vst.msk [vmem:[%s210 + $0x10] sm:$0xff] %vm211, %v203
    %215 = vst.msk [vmem:[%s210 + $0x18] sm:$0xff] %vm211, %v204
    %216 = vst.msk [vmem:[%s210 + $0x20] sm:$0xff] %vm211, %v205
    %217 = vst.msk [vmem:[%s210 + $0x28] sm:$0xff] %vm211, %v206
    %218 = vst.msk [vmem:[%s210 + $0x30] sm:$0xff] %vm211, %v207
    %219 = vst.msk [vmem:[%s210 + $0x38] sm:$0xff] %vm211, %v208
  $region14: #{fir_downsample2d.1} parent=0 // loop_footer
    %s20 = sadd.s32 1, %s16
  $region15: #{fir_downsample2d.1} parent=0 // loop_footer_branch
    %15 = sbr.rel target = $region11
  $region16: #{fir_downsample2d.1} parent=0 // loop_exit
    _
  // Predicated region
  $region17: #{fir_downsample2d.1} parent=0 // pred_check
    _
  $region18: #{fir_downsample2d.1} parent=0 // pred_check_branch
    %221 = sbr.rel (0) target = $region20
  $region19: #{fir_downsample2d.1} parent=0 // pred_region
    _
  $region20: #{fir_downsample2d.1} parent=0 // pred_fallthru
    _
  // Predicated region
  $region21: #{fir_downsample2d.1} parent=0 // pred_check
    _
  $region22: #{fir_downsample2d.1} parent=0 // pred_check_branch
    %223 = sbr.rel (0) target = $region24
  $region23: #{fir_downsample2d.1} parent=0 // pred_region
    _
  $region24: #{fir_downsample2d.1} parent=0 // pred_fallthru
    _

</llo_original>
